<compile_context>
chip_gen: v5e
topology: v5e:2x2
jax: 0.10.0
libtpu: 0.0.40
codegen_flags: <defaults>
</compile_context>

<pallas_src>
import functools

import jax
import jax.numpy as jnp
from jax.experimental import pallas as pl
from jax.experimental.pallas import tpu as pltpu


def _round_up(n, m):
    return (n + m - 1) // m * m


def _epilogue_dtype():
    """bf16 epilogue on chips with a bf16 VPU (v6e / v7x), f32 otherwise."""
    try:
        kind = jax.devices()[0].device_kind.lower()
    except Exception:
        return jnp.float32
    if ("v6" in kind) or ("v7" in kind) or ("7x" in kind):
        return jnp.bfloat16
    return jnp.float32


def _auto_b_tile(b, t_len, nf, k_pad, epi_bytes):
    """Largest batch tile that fills MXU rows without blowing the VMEM budget."""
    # Per batch row: double-buffered bf16 slab + f32 conv acc + epilogue copy.
    per_row = t_len * (2 * 2 * k_pad + 4 * nf + epi_bytes * nf)
    vmem_budget = 12 << 20  # conservative: fits v7x (64 MiB) and v5e scoped VMEM
    cap = max(1, vmem_budget // per_row)
    cands = [d for d in range(8, b + 1, 8) if b % d == 0]
    if not cands:
        return b
    good = [d for d in cands if d <= cap] or [min(cands)]
    multi = [d for d in good if b // d >= 2]  # keep >= 2 grid steps (v7x megacore)
    return max(multi) if multi else max(good)


def _shawn_kernel(x_ref, wconv_ref, bconv_ref, mask_ref, wfc_ref, bfc_ref,
                  out_ref, *, t_len, epi_dtype):
    bt = out_ref.shape[0]
    nf = bconv_ref.shape[-1]

    # Fused conv: one MXU matmul over all taps and all windows (bf16 -> f32).
    acc = jnp.dot(x_ref[...], wconv_ref[...],
                  preferred_element_type=jnp.float32)          # (bt*T, 3F)
    acc = jnp.maximum(acc + bconv_ref[...], 0.0)               # bias + ReLU, f32

    # Zero time positions that only exist due to padding (post-ReLU values are
    # >= 0 and every window has >= 1 valid position, so the max is unchanged),
    # then max-pool over time.  Reshape is layout-free (T % 8 == 0, NF % 128 == 0).
    acc = acc.reshape(bt, t_len, nf) * mask_ref[...].reshape(1, t_len, nf)
    pooled = jnp.max(acc.astype(epi_dtype), axis=1)            # (bt, 3F)

    # Dropout(p=0.2) is the identity at inference.  Lane-dense FC (3F, 128).
    logits = jnp.dot(pooled.astype(wfc_ref.dtype), wfc_ref[...],
                     preferred_element_type=jnp.float32)
    out_ref[...] = logits + bfc_ref[...]                       # (bt, C_pad)


def shawn_net_forward(x, params, *, windows=(3, 4, 5), b_tile=None):
    """x: (B, S, E) f32.  params: [(w_win, b_win) per window] + [(wfc, bfc)].

    w_win is (win, E, F) (torch Conv2d weight (F,1,win,E) transposed);
    wfc is (n_win*F, C) (torch Linear weight transposed).
    """
    conv_params = params[:-1]
    wfc, bfc = params[-1]
    b, s, e = x.shape
    f = conv_params[0][0].shape[-1]
    c = wfc.shape[-1]
    n_win = len(windows)
    wmax, wmin = max(windows), min(windows)
    nf = n_win * f

    t_len = _round_up(s - wmin + 1, 8)      # pooled time extent, 8-aligned
    s_pad = t_len + wmax - 1
    k = wmax * e
    k_pad = _round_up(k, 128)               # lane-dense MXU K (160 -> 256)
    c_pad = _round_up(max(c, 128), 128)     # lane-dense FC N / output store

    # --- im2col slab, built once in the wrapper (lane-dense, bf16) ----------
    x_pad = jnp.pad(x, ((0, 0), (0, s_pad - s), (0, 0)))
    slab = jnp.concatenate([x_pad[:, i:i + t_len, :] for i in range(wmax)],
                           axis=-1)                            # (B, T, wmax*E)
    slab = jnp.pad(slab, ((0, 0), (0, 0), (0, k_pad - k)))
    slab2d = slab.reshape(b * t_len, k_pad).astype(jnp.bfloat16)

    # --- fused conv weights: tap-zero-pad to wmax, concat over filters ------
    w_blocks, b_blocks = [], []
    for (w, bias), win in zip(conv_params, windows):
        w_p = jnp.pad(w, ((0, wmax - win), (0, 0), (0, 0)))
        w_blocks.append(w_p.reshape(k, f))
        b_blocks.append(bias.reshape(1, f))
    wconv = jnp.concatenate(w_blocks, axis=-1)                 # (wmax*E, 3F)
    wconv = jnp.pad(wconv, ((0, k_pad - k), (0, 0))).astype(jnp.bfloat16)
    bconv = jnp.concatenate(b_blocks, axis=-1).astype(jnp.float32)  # (1, 3F)

    # --- per-window time-validity mask, precomputed (0/1) -------------------
    t_idx = jnp.arange(t_len, dtype=jnp.int32)[:, None]
    limits = jnp.concatenate(
        [jnp.full((f,), s - win + 1, jnp.int32) for win in windows])
    mask = (t_idx < limits[None, :]).astype(jnp.float32)       # (T, 3F)

    # --- lane-dense FC operands ----------------------------------------------
    wfc_b = jnp.pad(wfc, ((0, 0), (0, c_pad - c))).astype(jnp.bfloat16)
    bfc_f = jnp.pad(bfc.reshape(1, c),
                    ((0, 0), (0, c_pad - c))).astype(jnp.float32)

    epi_dtype = _epilogue_dtype()
    if b_tile is None:
        b_tile = _auto_b_tile(b, t_len, nf, k_pad,
                              jnp.dtype(epi_dtype).itemsize)
    assert b % b_tile == 0
    assert b_tile == b or b_tile % 8 == 0
    grid = (b // b_tile,)

    # Explicit VMEM limit with headroom (v5e default scoped VMEM is only
    # 16 MiB; raising the limit is a no-op when the kernel uses less).
    est_vmem = (2 * b_tile * t_len * k_pad * 2            # dbl-buffered slab
                + b_tile * t_len * nf * 4                 # f32 conv acc
                + k_pad * nf * 2 + t_len * nf * 4
                + nf * c_pad * 2 + 2 * b_tile * c_pad * 4)
    vmem_limit = int(min(100 << 20, max(32 << 20, 2 * est_vmem)))

    kernel = functools.partial(_shawn_kernel, t_len=t_len, epi_dtype=epi_dtype)

    out = pl.pallas_call(
        kernel,
        out_shape=jax.ShapeDtypeStruct((b, c_pad), jnp.float32),
        grid=grid,
        in_specs=[
            pl.BlockSpec((b_tile * t_len, k_pad), lambda i: (i, 0)),  # im2col slab
            pl.BlockSpec((k_pad, nf), lambda i: (0, 0)),              # fused conv W
            pl.BlockSpec((1, nf), lambda i: (0, 0)),                  # fused conv b
            pl.BlockSpec((t_len, nf), lambda i: (0, 0)),              # validity mask
            pl.BlockSpec((nf, c_pad), lambda i: (0, 0)),              # fc W (padded)
            pl.BlockSpec((1, c_pad), lambda i: (0, 0)),               # fc b (padded)
        ],
        out_specs=pl.BlockSpec((b_tile, c_pad), lambda i: (i, 0)),
        compiler_params=pltpu.CompilerParams(
            dimension_semantics=("parallel",),
            vmem_limit_bytes=vmem_limit),
    )(slab2d, wconv, bconv, mask, wfc_b, bfc_f)

    return out[:, :c]


def init_params(key, embedding_dim, num_filters, windows, num_classes):
    params = []
    keys = jax.random.split(key, 2 * len(windows) + 2)
    for j, win in enumerate(windows):
        fan_in = win * embedding_dim
        bound = 1.0 / jnp.sqrt(fan_in)
        w = jax.random.uniform(keys[2 * j], (win, embedding_dim, num_filters),
                               jnp.float32, -bound, bound)
        b = jax.random.uniform(keys[2 * j + 1], (1, num_filters),
                               jnp.float32, -bound, bound)
        params.append((w, b))
    fc_in = len(windows) * num_filters
    bound = 1.0 / jnp.sqrt(fc_in)
    wfc = jax.random.uniform(keys[-2], (fc_in, num_classes),
                             jnp.float32, -bound, bound)
    bfc = jax.random.uniform(keys[-1], (1, num_classes),
                             jnp.float32, -bound, bound)
    params.append((wfc, bfc))
    return params


if __name__ == "__main__":
    # batch=2, seq=16, embedding_dim=32, num_filters=128, windows=(3,4,5),
    # num_classes=10, classify=True, custom_embedding=False.
    B, S, E = 2, 16, 32
    NUM_FILTERS = 128
    WINDOWS = (3, 4, 5)
    NUM_CLASSES = 10

    key = jax.random.PRNGKey(0)
    kx, kp = jax.random.split(key)
    x = jax.random.normal(kx, (B, S, E), jnp.float32)
    params = init_params(kp, E, NUM_FILTERS, WINDOWS, NUM_CLASSES)

    out = shawn_net_forward(x, params, windows=WINDOWS)
    out = jax.block_until_ready(out)
    assert out.shape == (B, NUM_CLASSES), out.shape

    # Pure-JAX reference of the ORIGINAL per-window semantics (same bf16
    # quantization of the matmul operands as the kernel's dtype policy).
    def ref_forward(x, params, windows):
        conv_params, (wfc, bfc) = params[:-1], params[-1]
        s = x.shape[1]
        xq = x.astype(jnp.bfloat16).astype(jnp.float32)
        feats = []
        for (w, bias), win in zip(conv_params, windows):
            wq = w.astype(jnp.bfloat16).astype(jnp.float32)
            T = s - win + 1
            acc = sum(jnp.einsum('bte,ef->btf', xq[:, i:i + T, :], wq[i])
                      for i in range(win)) + bias.reshape(1, 1, -1)
            feats.append(jnp.max(jnp.maximum(acc, 0.0), axis=1))
        h = jnp.concatenate(feats, axis=-1)
        wfcq = wfc.astype(jnp.bfloat16).astype(jnp.float32)
        return h @ wfcq + bfc.reshape(1, -1)

    ref = ref_forward(x, params, WINDOWS)
    assert jnp.allclose(out, ref, atol=3e-2, rtol=3e-2), \
        float(jnp.max(jnp.abs(out - ref)))

    print("KERNEL_OK")
</pallas_src>

<mosaic_0001>
module attributes {stable_mosaic.version = 11 : i64} {
  func.func @_shawn_kernel(%arg0: i32, %arg1: memref<32x256xbf16, #tpu.memory_space<vmem>>, %arg2: memref<256x384xbf16, #tpu.memory_space<vmem>>, %arg3: memref<1x384xf32, #tpu.memory_space<vmem>>, %arg4: memref<16x384xf32, #tpu.memory_space<vmem>>, %arg5: memref<384x128xbf16, #tpu.memory_space<vmem>>, %arg6: memref<1x128xf32, #tpu.memory_space<vmem>>, %arg7: memref<2x128xf32, #tpu.memory_space<vmem>>) attributes {dimension_semantics = [#tpu.dimension_semantics<parallel>], iteration_bounds = array<i64: 1>, scalar_prefetch = 0 : i64, scratch_operands = 0 : i64, tpu.core_type = #tpu.core_type<tc>, window_params = [{transform_indices = @transform_0, window_bounds = array<i64: 32, 256>}, {pipeline_mode = #tpu.pipeline_mode<synchronous>, transform_indices = @transform_1, window_bounds = array<i64: 256, 384>}, {pipeline_mode = #tpu.pipeline_mode<synchronous>, transform_indices = @transform_2, window_bounds = array<i64: 1, 384>}, {pipeline_mode = #tpu.pipeline_mode<synchronous>, transform_indices = @transform_3, window_bounds = array<i64: 16, 384>}, {pipeline_mode = #tpu.pipeline_mode<synchronous>, transform_indices = @transform_4, window_bounds = array<i64: 384, 128>}, {pipeline_mode = #tpu.pipeline_mode<synchronous>, transform_indices = @transform_5, window_bounds = array<i64: 1, 128>}, {transform_indices = @transform_6, window_bounds = array<i64: 2, 128>}]} {
    %c0 = arith.constant 0 : index
    %c0_0 = arith.constant 0 : index
    %0 = vector.load %arg1[%c0, %c0_0] : memref<32x256xbf16, #tpu.memory_space<vmem>>, vector<32x256xbf16>
    %c0_1 = arith.constant 0 : index
    %c0_2 = arith.constant 0 : index
    %1 = vector.load %arg2[%c0_1, %c0_2] : memref<256x384xbf16, #tpu.memory_space<vmem>>, vector<256x384xbf16>
    %cst = arith.constant dense<0.000000e+00> : vector<32x384xf32>
    %2 = tpu.matmul %0, %1, %cst {dimension_numbers = #tpu.dot_dimension_numbers<[1], [0], [0], [1], [0, 0, 1, 1], [], []>} : vector<32x256xbf16>, vector<256x384xbf16>, vector<32x384xf32> -> vector<32x384xf32>
    %c0_3 = arith.constant 0 : index
    %c0_4 = arith.constant 0 : index
    %3 = vector.load %arg3[%c0_3, %c0_4] : memref<1x384xf32, #tpu.memory_space<vmem>>, vector<1x384xf32>
    %4 = vector.broadcast %3 : vector<1x384xf32> to vector<32x384xf32>
    %5 = arith.addf %2, %4 : vector<32x384xf32>
    %cst_5 = arith.constant 0.000000e+00 : f32
    %6 = vector.broadcast %cst_5 : f32 to vector<32x384xf32>
    %7 = arith.maximumf %5, %6 : vector<32x384xf32>
    %8 = vector.shape_cast %7 : vector<32x384xf32> to vector<2x16x384xf32>
    %c0_6 = arith.constant 0 : index
    %c0_7 = arith.constant 0 : index
    %9 = vector.load %arg4[%c0_6, %c0_7] : memref<16x384xf32, #tpu.memory_space<vmem>>, vector<16x384xf32>
    %10 = vector.shape_cast %9 : vector<16x384xf32> to vector<1x16x384xf32>
    %11 = vector.broadcast %10 : vector<1x16x384xf32> to vector<2x16x384xf32>
    %12 = arith.mulf %8, %11 : vector<2x16x384xf32>
    %cst_8 = arith.constant dense<0xFF800000> : vector<2x384xf32>
    %13 = vector.multi_reduction <maximumf>, %12, %cst_8 [1] : vector<2x16x384xf32> to vector<2x384xf32>
    %14 = arith.truncf %13 : vector<2x384xf32> to vector<2x384xbf16>
    %c0_9 = arith.constant 0 : index
    %c0_10 = arith.constant 0 : index
    %15 = vector.load %arg5[%c0_9, %c0_10] : memref<384x128xbf16, #tpu.memory_space<vmem>>, vector<384x128xbf16>
    %cst_11 = arith.constant dense<0.000000e+00> : vector<2x128xf32>
    %16 = tpu.matmul %14, %15, %cst_11 {dimension_numbers = #tpu.dot_dimension_numbers<[1], [0], [0], [1], [0, 0, 1, 1], [], []>} : vector<2x384xbf16>, vector<384x128xbf16>, vector<2x128xf32> -> vector<2x128xf32>
    %c0_12 = arith.constant 0 : index
    %c0_13 = arith.constant 0 : index
    %17 = vector.load %arg6[%c0_12, %c0_13] : memref<1x128xf32, #tpu.memory_space<vmem>>, vector<1x128xf32>
    %18 = vector.broadcast %17 : vector<1x128xf32> to vector<2x128xf32>
    %19 = arith.addf %16, %18 : vector<2x128xf32>
    %c0_14 = arith.constant 0 : index
    %c0_15 = arith.constant 0 : index
    %20 = vector.load %arg7[%c0_14, %c0_15] : memref<2x128xf32, #tpu.memory_space<vmem>>, vector<2x128xf32>
    tpu.vector_store %arg7[%c0_14, %c0_15], %19 {strides = array<i32>} : memref<2x128xf32, #tpu.memory_space<vmem>>, vector<2x128xf32>,
    return
  }
  func.func @transform_0(%arg0: i32) -> (i32, i32) {
    %c0_i32 = arith.constant 0 : i32
    %c0_i32_0 = arith.constant 0 : i32
    return %arg0, %c0_i32 : i32, i32
  }
  func.func @transform_1(%arg0: i32) -> (i32, i32) {
    %c0_i32 = arith.constant 0 : i32
    %c0_i32_0 = arith.constant 0 : i32
    %c0_i32_1 = arith.constant 0 : i32
    return %c0_i32, %c0_i32_0 : i32, i32
  }
  func.func @transform_2(%arg0: i32) -> (i32, i32) {
    %c0_i32 = arith.constant 0 : i32
    %c0_i32_0 = arith.constant 0 : i32
    %c0_i32_1 = arith.constant 0 : i32
    return %c0_i32, %c0_i32_0 : i32, i32
  }
  func.func @transform_3(%arg0: i32) -> (i32, i32) {
    %c0_i32 = arith.constant 0 : i32
    %c0_i32_0 = arith.constant 0 : i32
    %c0_i32_1 = arith.constant 0 : i32
    return %c0_i32, %c0_i32_0 : i32, i32
  }
  func.func @transform_4(%arg0: i32) -> (i32, i32) {
    %c0_i32 = arith.constant 0 : i32
    %c0_i32_0 = arith.constant 0 : i32
    %c0_i32_1 = arith.constant 0 : i32
    return %c0_i32, %c0_i32_0 : i32, i32
  }
  func.func @transform_5(%arg0: i32) -> (i32, i32) {
    %c0_i32 = arith.constant 0 : i32
    %c0_i32_0 = arith.constant 0 : i32
    %c0_i32_1 = arith.constant 0 : i32
    return %c0_i32, %c0_i32_0 : i32, i32
  }
  func.func @transform_6(%arg0: i32) -> (i32, i32) {
    %c0_i32 = arith.constant 0 : i32
    %c0_i32_0 = arith.constant 0 : i32
    return %arg0, %c0_i32 : i32, i32
  }
}

</mosaic_0001>

<llo_original>
// kernel: tpu_custom_call.1
$region0: #{tpu_custom_call.1}
  #allocation0 [shape = 'u32[]', space=smem, size = 0x4, offset = 0x4, fixed_abs, tag = 'smem constant byte address 0x4 - core index']
  #allocation1 [shape = 'u32[72,128]{1,0:T(1,128)}', space=vmem, size = 0x9000, scoped, tag = 'internal scratch']
  %s0 = inlined_call_operand.hbm [shape: bf16[32,256], index: 0, kind: input, shape index: {}]
  %s1 = inlined_call_operand.hbm [shape: bf16[256,384], index: 1, kind: input, shape index: {}]
  %s2 = inlined_call_operand.hbm [shape: f32[1,384], index: 2, kind: input, shape index: {}]
  %s3 = inlined_call_operand.hbm [shape: f32[16,384], index: 3, kind: input, shape index: {}]
  %s4 = inlined_call_operand.hbm [shape: bf16[384,128], index: 4, kind: input, shape index: {}]
  %s5 = inlined_call_operand.vmem [shape: f32[1,128], index: 5, kind: input, shape index: {}]
  %s6 = inlined_call_operand.hbm [shape: f32[2,128], index: 6, kind: output, shape index: {}]
  %s7 = sld [smem:[#allocation0]]
  $region54: #{tpu_custom_call.1} parent=0
    _
  %s9 = ssub.s32 1, %s7
  %s10 = scalar_select 0, %s9, %s7
  $region1: #{tpu_custom_call.1} parent=0
    #allocation2 [shape = 'u8[16384]{0}', space=vmem, size = 0x4000, scoped, tag = 'input window, operand 0, single buffered']
    #allocation3 [shape = 's32[1]{0}', space=sflag, size = 0x4, scoped, tag = 'scoped memory for tpu_custom_call.1']
    #allocation4 [shape = 's32[1]{0}', space=sflag, size = 0x4, scoped, tag = 'scoped memory for tpu_custom_call.1']
    #allocation5 [shape = 'u8[196608]{0}', space=vmem, size = 0x30000, scoped, tag = 'input window, operand 1, single buffered']
    #allocation6 [shape = 's32[1]{0}', space=sflag, size = 0x4, scoped, tag = 'scoped memory for tpu_custom_call.1']
    #allocation7 [shape = 'u8[1536]{0}', space=vmem, size = 0x800, scoped, tag = 'input window, operand 2, single buffered']
    #allocation8 [shape = 'u8[24576]{0}', space=vmem, size = 0x6000, scoped, tag = 'input window, operand 3, single buffered']
    #allocation9 [shape = 's32[1]{0}', space=sflag, size = 0x4, scoped, tag = 'scoped memory for tpu_custom_call.1']
    #allocation10 [shape = 'u8[98304]{0}', space=vmem, size = 0x18000, scoped, tag = 'input window, operand 4, single buffered']
    #allocation11 [shape = 'u8[1024]{0}', space=vmem, size = 0x400, scoped, tag = 'output window, operand 0, single buffered']
    %11 = vsyncpa [#allocation3], 0
    %12 = vsyncpa [#allocation6], 0
    %13 = vsyncpa [#allocation9], 0
    %14 = vsyncpa [#allocation4], 0
    // Predicated region
    $region2: #{tpu_custom_call.1} parent=1 // pred_check
      _
    $region3: #{tpu_custom_call.1} parent=1 // pred_check_branch
      %16 = sbr.rel (0) target = $region5
    $region4: #{tpu_custom_call.1} parent=1 // pred_region
      %18 = vsyncadd [#allocation3], 0
      %s19 = sshll.u32 %s0, 4
      %s20 = int_to_ptr.hbm [resolvable:$true] %s19
      %s21 = sshll.u32 [#allocation2], 4
      %s22 = int_to_ptr.vmem [resolvable:$true] %s21
      %27 = dma.hbm_to_vmem [thread:$0]  %s20, 512, %s22, [#allocation3], 128, 128, 8
    $region5: #{tpu_custom_call.1} parent=1 // pred_fallthru
      _
    // Predicated region
    $region6: #{tpu_custom_call.1} parent=1 // pred_check
      _
    $region7: #{tpu_custom_call.1} parent=1 // pred_check_branch
      %29 = sbr.rel (0) target = $region9
    $region8: #{tpu_custom_call.1} parent=1 // pred_region
      %31 = vsyncadd [#allocation6], 0
      %s32 = sshll.u32 %s1, 4
      %s33 = int_to_ptr.hbm [resolvable:$true] %s32
      %s34 = sshll.u32 [#allocation5], 4
      %s35 = int_to_ptr.vmem [resolvable:$true] %s34
      %40 = dma.hbm_to_vmem [thread:$0]  %s33, 6144, %s35, [#allocation6], 192, 192, 12
    $region9: #{tpu_custom_call.1} parent=1 // pred_fallthru
      _
    // Predicated region
    $region10: #{tpu_custom_call.1} parent=1 // pred_check
      _
    $region11: #{tpu_custom_call.1} parent=1 // pred_check_branch
      %42 = sbr.rel (0) target = $region13
    $region12: #{tpu_custom_call.1} parent=1 // pred_region
      %44 = vsyncadd [#allocation6], 0
      %s46 = sshll.u32 %s2, 4
      %s47 = int_to_ptr.hbm [resolvable:$true] %s46
      %s48 = sshll.u32 [#allocation7], 4
      %s49 = int_to_ptr.vmem [resolvable:$true] %s48
      %51 = dma.hbm_to_vmem [thread:$0]  %s47, 48, %s49, [#allocation6]
    $region13: #{tpu_custom_call.1} parent=1 // pred_fallthru
      _
    // Predicated region
    $region14: #{tpu_custom_call.1} parent=1 // pred_check
      _
    $region15: #{tpu_custom_call.1} parent=1 // pred_check_branch
      %53 = sbr.rel (0) target = $region17
    $region16: #{tpu_custom_call.1} parent=1 // pred_region
      %55 = vsyncadd [#allocation9], 0
      %s56 = sshll.u32 %s3, 4
      %s57 = int_to_ptr.hbm [resolvable:$true] %s56
      %s58 = sshll.u32 [#allocation8], 4
      %s59 = int_to_ptr.vmem [resolvable:$true] %s58
      %64 = dma.hbm_to_vmem [thread:$0]  %s57, 768, %s59, [#allocation9], 384, 384, 24
    $region17: #{tpu_custom_call.1} parent=1 // pred_fallthru
      _
    // Predicated region
    $region18: #{tpu_custom_call.1} parent=1 // pred_check
      _
    $region19: #{tpu_custom_call.1} parent=1 // pred_check_branch
      %66 = sbr.rel (0) target = $region21
    $region20: #{tpu_custom_call.1} parent=1 // pred_region
      %68 = vsyncadd [#allocation9], 0
      %s69 = sshll.u32 %s4, 4
      %s70 = int_to_ptr.hbm [resolvable:$true] %s69
      %s71 = sshll.u32 [#allocation10], 4
      %s72 = int_to_ptr.vmem [resolvable:$true] %s71
      %77 = dma.hbm_to_vmem [thread:$0]  %s70, 3072, %s72, [#allocation9], 64, 64, 4
    $region21: #{tpu_custom_call.1} parent=1 // pred_fallthru
      _
    // Predicated region
    $region22: #{tpu_custom_call.1} parent=1 // pred_check
      _
    $region23: #{tpu_custom_call.1} parent=1 // pred_check_branch
      %79 = sbr.rel (0) target = $region25
    $region24: #{tpu_custom_call.1} parent=1 // pred_region
      _
    $region25: #{tpu_custom_call.1} parent=1 // pred_fallthru
      _
    // Predicated region
    $region26: #{tpu_custom_call.1} parent=1 // pred_check
      _
    $region27: #{tpu_custom_call.1} parent=1 // pred_check_branch
      %81 = sbr.rel (0) target = $region29
    $region28: #{tpu_custom_call.1} parent=1 // pred_region
      %83 = dma.done [#allocation3], 512
    $region29: #{tpu_custom_call.1} parent=1 // pred_fallthru
      _
    // Predicated region
    $region30: #{tpu_custom_call.1} parent=1 // pred_check
      _
    $region31: #{tpu_custom_call.1} parent=1 // pred_check_branch
      %85 = sbr.rel (0) target = $region33
    $region32: #{tpu_custom_call.1} parent=1 // pred_region
      %87 = dma.done [#allocation6], 6144
    $region33: #{tpu_custom_call.1} parent=1 // pred_fallthru
      _
    // Predicated region
    $region34: #{tpu_custom_call.1} parent=1 // pred_check
      _
    $region35: #{tpu_custom_call.1} parent=1 // pred_check_branch
      %89 = sbr.rel (0) target = $region37
    $region36: #{tpu_custom_call.1} parent=1 // pred_region
      %91 = dma.done [#allocation6], 48
    $region37: #{tpu_custom_call.1} parent=1 // pred_fallthru
      _
    // Predicated region
    $region38: #{tpu_custom_call.1} parent=1 // pred_check
      _
    $region39: #{tpu_custom_call.1} parent=1 // pred_check_branch
      %93 = sbr.rel (0) target = $region41
    $region40: #{tpu_custom_call.1} parent=1 // pred_region
      %95 = dma.done [#allocation9], 768
    $region41: #{tpu_custom_call.1} parent=1 // pred_fallthru
      _
    // Predicated region
    $region42: #{tpu_custom_call.1} parent=1 // pred_check
      _
    $region43: #{tpu_custom_call.1} parent=1 // pred_check_branch
      %97 = sbr.rel (0) target = $region45
    $region44: #{tpu_custom_call.1} parent=1 // pred_region
      %99 = dma.done [#allocation9], 3072
    $region45: #{tpu_custom_call.1} parent=1 // pred_fallthru
      _
    %v100 = vld [vmem:[#allocation2] sm:$0xff]
    %v101 = vld [vmem:[#allocation2 + $0x8] sm:$0xff]
    %v102 = vld [vmem:[#allocation2 + $0x10] sm:$0xff]
    %v103 = vld [vmem:[#allocation2 + $0x18] sm:$0xff]
    %v104 = vld [vmem:[#allocation5] sm:$0xff]
    %v105 = vld [vmem:[#allocation5 + $0x8] sm:$0xf]
    %v106 = vld [vmem:[#allocation5 + $0xc] sm:$0xff]
    %v107 = vld [vmem:[#allocation5 + $0x14] sm:$0xf]
    %v108 = vld [vmem:[#allocation5 + $0x18] sm:$0xff]
    %v109 = vld [vmem:[#allocation5 + $0x20] sm:$0xf]
    %v110 = vld [vmem:[#allocation5 + $0x24] sm:$0xff]
    %v111 = vld [vmem:[#allocation5 + $0x2c] sm:$0xf]
    %v112 = vld [vmem:[#allocation5 + $0x30] sm:$0xff]
    %v113 = vld [vmem:[#allocation5 + $0x38] sm:$0xf]
    %v114 = vld [vmem:[#allocation5 + $0x3c] sm:$0xff]
    %v115 = vld [vmem:[#allocation5 + $0x44] sm:$0xf]
    %v116 = vld [vmem:[#allocation5 + $0x48] sm:$0xff]
    %v117 = vld [vmem:[#allocation5 + $0x50] sm:$0xf]
    %v118 = vld [vmem:[#allocation5 + $0x54] sm:$0xff]
    %v119 = vld [vmem:[#allocation5 + $0x5c] sm:$0xf]
    %v120 = vld [vmem:[#allocation5 + $0x60] sm:$0xff]
    %v121 = vld [vmem:[#allocation5 + $0x68] sm:$0xf]
    %v122 = vld [vmem:[#allocation5 + $0x6c] sm:$0xff]
    %v123 = vld [vmem:[#allocation5 + $0x74] sm:$0xf]
    %v124 = vld [vmem:[#allocation5 + $0x78] sm:$0xff]
    %v125 = vld [vmem:[#allocation5 + $0x80] sm:$0xf]
    %v126 = vld [vmem:[#allocation5 + $0x84] sm:$0xff]
    %v127 = vld [vmem:[#allocation5 + $0x8c] sm:$0xf]
    %v128 = vld [vmem:[#allocation5 + $0x90] sm:$0xff]
    %v129 = vld [vmem:[#allocation5 + $0x98] sm:$0xf]
    %v130 = vld [vmem:[#allocation5 + $0x9c] sm:$0xff]
    %v131 = vld [vmem:[#allocation5 + $0xa4] sm:$0xf]
    %v132 = vld [vmem:[#allocation5 + $0xa8] sm:$0xff]
    %v133 = vld [vmem:[#allocation5 + $0xb0] sm:$0xf]
    %v134 = vld [vmem:[#allocation5 + $0xb4] sm:$0xff]
    %v135 = vld [vmem:[#allocation5 + $0xbc] sm:$0xf]
    %v136 = vld [vmem:[#allocation5 + $0xc0] sm:$0xff]
    %v137 = vld [vmem:[#allocation5 + $0xc8] sm:$0xf]
    %v138 = vld [vmem:[#allocation5 + $0xcc] sm:$0xff]
    %v139 = vld [vmem:[#allocation5 + $0xd4] sm:$0xf]
    %v140 = vld [vmem:[#allocation5 + $0xd8] sm:$0xff]
    %v141 = vld [vmem:[#allocation5 + $0xe0] sm:$0xf]
    %v142 = vld [vmem:[#allocation5 + $0xe4] sm:$0xff]
    %v143 = vld [vmem:[#allocation5 + $0xec] sm:$0xf]
    %v144 = vld [vmem:[#allocation5 + $0xf0] sm:$0xff]
    %v145 = vld [vmem:[#allocation5 + $0xf8] sm:$0xf]
    %v146 = vld [vmem:[#allocation5 + $0xfc] sm:$0xff]
    %v147 = vld [vmem:[#allocation5 + $0x104] sm:$0xf]
    %v148 = vld [vmem:[#allocation5 + $0x108] sm:$0xff]
    %v149 = vld [vmem:[#allocation5 + $0x110] sm:$0xf]
    %v150 = vld [vmem:[#allocation5 + $0x114] sm:$0xff]
    %v151 = vld [vmem:[#allocation5 + $0x11c] sm:$0xf]
    %v152 = vld [vmem:[#allocation5 + $0x120] sm:$0xff]
    %v153 = vld [vmem:[#allocation5 + $0x128] sm:$0xf]
    %v154 = vld [vmem:[#allocation5 + $0x12c] sm:$0xff]
    %v155 = vld [vmem:[#allocation5 + $0x134] sm:$0xf]
    %v156 = vld [vmem:[#allocation5 + $0x138] sm:$0xff]
    %v157 = vld [vmem:[#allocation5 + $0x140] sm:$0xf]
    %v158 = vld [vmem:[#allocation5 + $0x144] sm:$0xff]
    %v159 = vld [vmem:[#allocation5 + $0x14c] sm:$0xf]
    %v160 = vld [vmem:[#allocation5 + $0x150] sm:$0xff]
    %v161 = vld [vmem:[#allocation5 + $0x158] sm:$0xf]
    %v162 = vld [vmem:[#allocation5 + $0x15c] sm:$0xff]
    %v163 = vld [vmem:[#allocation5 + $0x164] sm:$0xf]
    %v164 = vld [vmem:[#allocation5 + $0x168] sm:$0xff]
    %v165 = vld [vmem:[#allocation5 + $0x170] sm:$0xf]
    %v166 = vld [vmem:[#allocation5 + $0x174] sm:$0xff]
    %v167 = vld [vmem:[#allocation5 + $0x17c] sm:$0xf]
    %v168 = vld [vmem:[#allocation7] sm:$0x7]
    %v170 = vperm.slane %v168, 0
    %v171 = vperm.slane %v168, 1
    %v172 = vperm.slane %v168, 2
    %v180 = vunpack.c.l.b16 %v100
    %v181 = vunpack.c.h.b16 %v100
    %v182 = vunpack.c.l.b16 %v101
    %v183 = vunpack.c.h.b16 %v101
    %v184 = vunpack.c.l.b16 %v102
    %v185 = vunpack.c.h.b16 %v102
    %v186 = vunpack.c.l.b16 %v103
    %v187 = vunpack.c.h.b16 %v103
    %v188 = vpack.c.b16 %v182, %v180
    %v189 = vpack.c.b16 %v183, %v181
    %v190 = vpack.c.b16 %v186, %v184
    %v191 = vpack.c.b16 %v187, %v185
    %v260 = vunpack.c.l.b16 %v104
    %v261 = vunpack.c.h.b16 %v104
    %v262 = vunpack.c.l.b16 %v105
    %v263 = vunpack.c.l.b16 %v106
    %v264 = vunpack.c.h.b16 %v106
    %v265 = vunpack.c.l.b16 %v107
    %v266 = vunpack.c.l.b16 %v108
    %v267 = vunpack.c.h.b16 %v108
    %v268 = vunpack.c.l.b16 %v109
    %v269 = vunpack.c.l.b16 %v110
    %v270 = vunpack.c.h.b16 %v110
    %v271 = vunpack.c.l.b16 %v111
    %v272 = vunpack.c.l.b16 %v112
    %v273 = vunpack.c.h.b16 %v112
    %v274 = vunpack.c.l.b16 %v113
    %v275 = vunpack.c.l.b16 %v114
    %v276 = vunpack.c.h.b16 %v114
    %v277 = vunpack.c.l.b16 %v115
    %v278 = vunpack.c.l.b16 %v116
    %v279 = vunpack.c.h.b16 %v116
    %v280 = vunpack.c.l.b16 %v117
    %v281 = vunpack.c.l.b16 %v118
    %v282 = vunpack.c.h.b16 %v118
    %v283 = vunpack.c.l.b16 %v119
    %v284 = vunpack.c.l.b16 %v120
    %v285 = vunpack.c.h.b16 %v120
    %v286 = vunpack.c.l.b16 %v121
    %v287 = vunpack.c.l.b16 %v122
    %v288 = vunpack.c.h.b16 %v122
    %v289 = vunpack.c.l.b16 %v123
    %v290 = vunpack.c.l.b16 %v124
    %v291 = vunpack.c.h.b16 %v124
    %v292 = vunpack.c.l.b16 %v125
    %v293 = vunpack.c.l.b16 %v126
    %v294 = vunpack.c.h.b16 %v126
    %v295 = vunpack.c.l.b16 %v127
    %v296 = vunpack.c.l.b16 %v128
    %v297 = vunpack.c.h.b16 %v128
    %v298 = vunpack.c.l.b16 %v129
    %v299 = vunpack.c.l.b16 %v130
    %v300 = vunpack.c.h.b16 %v130
    %v301 = vunpack.c.l.b16 %v131
    %v302 = vunpack.c.l.b16 %v132
    %v303 = vunpack.c.h.b16 %v132
    %v304 = vunpack.c.l.b16 %v133
    %v305 = vunpack.c.l.b16 %v134
    %v306 = vunpack.c.h.b16 %v134
    %v307 = vunpack.c.l.b16 %v135
    %v308 = vunpack.c.l.b16 %v136
    %v309 = vunpack.c.h.b16 %v136
    %v310 = vunpack.c.l.b16 %v137
    %v311 = vunpack.c.l.b16 %v138
    %v312 = vunpack.c.h.b16 %v138
    %v313 = vunpack.c.l.b16 %v139
    %v314 = vunpack.c.l.b16 %v140
    %v315 = vunpack.c.h.b16 %v140
    %v316 = vunpack.c.l.b16 %v141
    %v317 = vunpack.c.l.b16 %v142
    %v318 = vunpack.c.h.b16 %v142
    %v319 = vunpack.c.l.b16 %v143
    %v320 = vunpack.c.l.b16 %v144
    %v321 = vunpack.c.h.b16 %v144
    %v322 = vunpack.c.l.b16 %v145
    %v323 = vunpack.c.l.b16 %v146
    %v324 = vunpack.c.h.b16 %v146
    %v325 = vunpack.c.l.b16 %v147
    %v326 = vunpack.c.l.b16 %v148
    %v327 = vunpack.c.h.b16 %v148
    %v328 = vunpack.c.l.b16 %v149
    %v329 = vunpack.c.l.b16 %v150
    %v330 = vunpack.c.h.b16 %v150
    %v331 = vunpack.c.l.b16 %v151
    %v332 = vunpack.c.l.b16 %v152
    %v333 = vunpack.c.h.b16 %v152
    %v334 = vunpack.c.l.b16 %v153
    %v335 = vunpack.c.l.b16 %v154
    %v336 = vunpack.c.h.b16 %v154
    %v337 = vunpack.c.l.b16 %v155
    %v338 = vunpack.c.l.b16 %v156
    %v339 = vunpack.c.h.b16 %v156
    %v340 = vunpack.c.l.b16 %v157
    %v341 = vunpack.c.l.b16 %v158
    %v342 = vunpack.c.h.b16 %v158
    %v343 = vunpack.c.l.b16 %v159
    %v344 = vunpack.c.l.b16 %v160
    %v345 = vunpack.c.h.b16 %v160
    %v346 = vunpack.c.l.b16 %v161
    %v347 = vunpack.c.l.b16 %v162
    %v348 = vunpack.c.h.b16 %v162
    %v349 = vunpack.c.l.b16 %v163
    %v350 = vunpack.c.l.b16 %v164
    %v351 = vunpack.c.h.b16 %v164
    %v352 = vunpack.c.l.b16 %v165
    %v353 = vunpack.c.l.b16 %v166
    %v354 = vunpack.c.h.b16 %v166
    %v355 = vunpack.c.l.b16 %v167
    %v356 = vpack.c.b16 %v263, %v260
    %v357 = vpack.c.b16 %v264, %v261
    %v358 = vpack.c.b16 %v265, %v262
    %v359 = vpack.c.b16 %v269, %v266
    %v360 = vpack.c.b16 %v270, %v267
    %v361 = vpack.c.b16 %v271, %v268
    %v362 = vpack.c.b16 %v275, %v272
    %v363 = vpack.c.b16 %v276, %v273
    %v364 = vpack.c.b16 %v277, %v274
    %v365 = vpack.c.b16 %v281, %v278
    %v366 = vpack.c.b16 %v282, %v279
    %v367 = vpack.c.b16 %v283, %v280
    %v368 = vpack.c.b16 %v287, %v284
    %v369 = vpack.c.b16 %v288, %v285
    %v370 = vpack.c.b16 %v289, %v286
    %v371 = vpack.c.b16 %v293, %v290
    %v372 = vpack.c.b16 %v294, %v291
    %v373 = vpack.c.b16 %v295, %v292
    %v374 = vpack.c.b16 %v299, %v296
    %v375 = vpack.c.b16 %v300, %v297
    %v376 = vpack.c.b16 %v301, %v298
    %v377 = vpack.c.b16 %v305, %v302
    %v378 = vpack.c.b16 %v306, %v303
    %v379 = vpack.c.b16 %v307, %v304
    %v380 = vpack.c.b16 %v311, %v308
    %v381 = vpack.c.b16 %v312, %v309
    %v382 = vpack.c.b16 %v313, %v310
    %v383 = vpack.c.b16 %v317, %v314
    %v384 = vpack.c.b16 %v318, %v315
    %v385 = vpack.c.b16 %v319, %v316
    %v386 = vpack.c.b16 %v323, %v320
    %v387 = vpack.c.b16 %v324, %v321
    %v388 = vpack.c.b16 %v325, %v322
    %v389 = vpack.c.b16 %v329, %v326
    %v390 = vpack.c.b16 %v330, %v327
    %v391 = vpack.c.b16 %v331, %v328
    %v392 = vpack.c.b16 %v335, %v332
    %v393 = vpack.c.b16 %v336, %v333
    %v394 = vpack.c.b16 %v337, %v334
    %v395 = vpack.c.b16 %v341, %v338
    %v396 = vpack.c.b16 %v342, %v339
    %v397 = vpack.c.b16 %v343, %v340
    %v398 = vpack.c.b16 %v347, %v344
    %v399 = vpack.c.b16 %v348, %v345
    %v400 = vpack.c.b16 %v349, %v346
    %v401 = vpack.c.b16 %v353, %v350
    %v402 = vpack.c.b16 %v354, %v351
    %v403 = vpack.c.b16 %v355, %v352
    %452 = vmatpush.bf16.msra.mxu0 %v377
    %453 = vmatpush.bf16.msra.mxu0 %v374
    %454 = vmatpush.bf16.msra.mxu0 %v371
    %455 = vmatpush.bf16.msra.mxu0 %v368
    %456 = vmatpush.bf16.msra.mxu0 %v365
    %457 = vmatpush.bf16.msra.mxu0 %v362
    %458 = vmatpush.bf16.msra.mxu0 %v359
    %459 = vmatpush.bf16.msra.mxu0 %v356
    %460 = vmatmul.bf16.gmra.mxu0 %v188
    %v461 = vpop.f32.mrf.mxu0
    %v462 = vadd.f32 %v170, %v461
    %v463 = vpop.f32.mrf.mxu0
    %v464 = vadd.f32 %v170, %v463
    %465 = vmatmul.bf16.gmra.mxu0 %v190
    %v466 = vpop.f32.mrf.mxu0
    %v467 = vadd.f32 %v170, %v466
    %v468 = vpop.f32.mrf.mxu0
    %v469 = vadd.f32 %v170, %v468
    %470 = vdwg.mxu0
    %471 = vmatpush.bf16.msra.mxu0 %v401
    %472 = vmatpush.bf16.msra.mxu0 %v398
    %473 = vmatpush.bf16.msra.mxu0 %v395
    %474 = vmatpush.bf16.msra.mxu0 %v392
    %475 = vmatpush.bf16.msra.mxu0 %v389
    %476 = vmatpush.bf16.msra.mxu0 %v386
    %477 = vmatpush.bf16.msra.mxu0 %v383
    %478 = vmatpush.bf16.msra.mxu0 %v380
    %479 = vmatmul.bf16.gmra.mxu0 %v189
    %v480 = vpop.f32.mrf.mxu0
    %v481 = vadd.f32 %v462, %v480
    %v482 = vpop.f32.mrf.mxu0
    %v483 = vadd.f32 %v464, %v482
    %484 = vmatmul.bf16.gmra.mxu0 %v191
    %v485 = vpop.f32.mrf.mxu0
    %v486 = vadd.f32 %v467, %v485
    %v487 = vpop.f32.mrf.mxu0
    %v488 = vadd.f32 %v469, %v487
    %489 = vdwg.mxu0
    %490 = vmatpush.bf16.msra.mxu0 %v378
    %491 = vmatpush.bf16.msra.mxu0 %v375
    %492 = vmatpush.bf16.msra.mxu0 %v372
    %493 = vmatpush.bf16.msra.mxu0 %v369
    %494 = vmatpush.bf16.msra.mxu0 %v366
    %495 = vmatpush.bf16.msra.mxu0 %v363
    %496 = vmatpush.bf16.msra.mxu0 %v360
    %497 = vmatpush.bf16.msra.mxu0 %v357
    %498 = vmatmul.bf16.gmra.mxu0 %v188
    %v499 = vpop.f32.mrf.mxu0
    %v500 = vadd.f32 %v171, %v499
    %v501 = vpop.f32.mrf.mxu0
    %v502 = vadd.f32 %v171, %v501
    %503 = vmatmul.bf16.gmra.mxu0 %v190
    %v504 = vpop.f32.mrf.mxu0
    %v505 = vadd.f32 %v171, %v504
    %v506 = vpop.f32.mrf.mxu0
    %v507 = vadd.f32 %v171, %v506
    %508 = vdwg.mxu0
    %509 = vmatpush.bf16.msra.mxu0 %v402
    %510 = vmatpush.bf16.msra.mxu0 %v399
    %511 = vmatpush.bf16.msra.mxu0 %v396
    %512 = vmatpush.bf16.msra.mxu0 %v393
    %513 = vmatpush.bf16.msra.mxu0 %v390
    %514 = vmatpush.bf16.msra.mxu0 %v387
    %515 = vmatpush.bf16.msra.mxu0 %v384
    %516 = vmatpush.bf16.msra.mxu0 %v381
    %517 = vmatmul.bf16.gmra.mxu0 %v189
    %v518 = vpop.f32.mrf.mxu0
    %v519 = vadd.f32 %v500, %v518
    %v520 = vpop.f32.mrf.mxu0
    %v521 = vadd.f32 %v502, %v520
    %522 = vmatmul.bf16.gmra.mxu0 %v191
    %v523 = vpop.f32.mrf.mxu0
    %v524 = vadd.f32 %v505, %v523
    %v525 = vpop.f32.mrf.mxu0
    %v526 = vadd.f32 %v507, %v525
    %527 = vdwg.mxu0
    %528 = vmatpush.bf16.msra.mxu0 %v379
    %529 = vmatpush.bf16.msra.mxu0 %v376
    %530 = vmatpush.bf16.msra.mxu0 %v373
    %531 = vmatpush.bf16.msra.mxu0 %v370
    %532 = vmatpush.bf16.msra.mxu0 %v367
    %533 = vmatpush.bf16.msra.mxu0 %v364
    %534 = vmatpush.bf16.msra.mxu0 %v361
    %535 = vmatpush.bf16.msra.mxu0 %v358
    %536 = vmatmul.bf16.gmra.mxu0 %v188
    %v537 = vpop.f32.mrf.mxu0
    %v538 = vadd.f32 %v172, %v537
    %v539 = vpop.f32.mrf.mxu0
    %v540 = vadd.f32 %v172, %v539
    %541 = vmatmul.bf16.gmra.mxu0 %v190
    %v542 = vpop.f32.mrf.mxu0
    %v543 = vadd.f32 %v172, %v542
    %v544 = vpop.f32.mrf.mxu0
    %v545 = vadd.f32 %v172, %v544
    %546 = vdwg.mxu0
    %547 = vmatpush.bf16.msra.mxu0 %v403
    %548 = vmatpush.bf16.msra.mxu0 %v400
    %549 = vmatpush.bf16.msra.mxu0 %v397
    %550 = vmatpush.bf16.msra.mxu0 %v394
    %551 = vmatpush.bf16.msra.mxu0 %v391
    %552 = vmatpush.bf16.msra.mxu0 %v388
    %553 = vmatpush.bf16.msra.mxu0 %v385
    %554 = vmatpush.bf16.msra.mxu0 %v382
    %555 = vmatmul.bf16.gmra.mxu0 %v189
    %v556 = vpop.f32.mrf.mxu0
    %v557 = vadd.f32 %v538, %v556
    %v558 = vpop.f32.mrf.mxu0
    %v559 = vadd.f32 %v540, %v558
    %560 = vmatmul.bf16.gmra.mxu0 %v191
    %v561 = vpop.f32.mrf.mxu0
    %v562 = vadd.f32 %v543, %v561
    %v563 = vpop.f32.mrf.mxu0
    %v564 = vadd.f32 %v545, %v563
    %565 = vdwg.mxu0
    %v566 = vmax.f32 %v481, 0.0
    %v567 = vmax.f32 %v519, 0.0
    %v568 = vmax.f32 %v557, 0.0
    %v569 = vmax.f32 %v483, 0.0
    %v570 = vmax.f32 %v521, 0.0
    %v571 = vmax.f32 %v559, 0.0
    %v572 = vmax.f32 %v486, 0.0
    %v573 = vmax.f32 %v524, 0.0
    %v574 = vmax.f32 %v562, 0.0
    %v575 = vmax.f32 %v488, 0.0
    %v576 = vmax.f32 %v526, 0.0
    %v577 = vmax.f32 %v564, 0.0
    %v578 = vld [vmem:[#allocation8] sm:$0xff]
    %v579 = vld [vmem:[#allocation8 + $0x8] sm:$0xff]
    %v580 = vld [vmem:[#allocation8 + $0x10] sm:$0xff]
    %v581 = vld [vmem:[#allocation8 + $0x18] sm:$0xff]
    %v582 = vld [vmem:[#allocation8 + $0x20] sm:$0xff]
    %v583 = vld [vmem:[#allocation8 + $0x28] sm:$0xff]
    %v584 = vmul.f32 %v566, %v578
    %v585 = vmul.f32 %v567, %v579
    %v586 = vmul.f32 %v568, %v580
    %v587 = vmul.f32 %v569, %v581
    %v588 = vmul.f32 %v570, %v582
    %v589 = vmul.f32 %v571, %v583
    %v590 = vmul.f32 %v572, %v578
    %v591 = vmul.f32 %v573, %v579
    %v592 = vmul.f32 %v574, %v580
    %v593 = vmul.f32 %v575, %v581
    %v594 = vmul.f32 %v576, %v582
    %v595 = vmul.f32 %v577, %v583
    %v596 = vmax.f32 %v584, %v587
    %v597 = vrot.slane %v596, 4
    %v598 = vmax.f32 %v596, %v597
    %v599 = vrot.slane %v598, 2
    %v600 = vmax.f32 %v598, %v599
    %v601 = vrot.slane %v600, 1
    %v602 = vmax.f32 %v600, %v601
    %v603 = vmax.f32 %v585, %v588
    %v604 = vrot.slane %v603, 4
    %v605 = vmax.f32 %v603, %v604
    %v606 = vrot.slane %v605, 2
    %v607 = vmax.f32 %v605, %v606
    %v608 = vrot.slane %v607, 1
    %v609 = vmax.f32 %v607, %v608
    %v610 = vmax.f32 %v586, %v589
    %v611 = vrot.slane %v610, 4
    %v612 = vmax.f32 %v610, %v611
    %v613 = vrot.slane %v612, 2
    %v614 = vmax.f32 %v612, %v613
    %v615 = vrot.slane %v614, 1
    %v616 = vmax.f32 %v614, %v615
    %v617 = vmax.f32 %v590, %v593
    %v618 = vrot.slane %v617, 4
    %v619 = vmax.f32 %v617, %v618
    %v620 = vrot.slane %v619, 2
    %v621 = vmax.f32 %v619, %v620
    %v622 = vrot.slane %v621, 1
    %v623 = vmax.f32 %v621, %v622
    %v624 = vmax.f32 %v591, %v594
    %v625 = vrot.slane %v624, 4
    %v626 = vmax.f32 %v624, %v625
    %v627 = vrot.slane %v626, 2
    %v628 = vmax.f32 %v626, %v627
    %v629 = vrot.slane %v628, 1
    %v630 = vmax.f32 %v628, %v629
    %v631 = vmax.f32 %v592, %v595
    %v632 = vrot.slane %v631, 4
    %v633 = vmax.f32 %v631, %v632
    %v634 = vrot.slane %v633, 2
    %v635 = vmax.f32 %v633, %v634
    %v636 = vrot.slane %v635, 1
    %v637 = vmax.f32 %v635, %v636
    %v638 = vpack.c.bf16 %v602, %v602
    %v639 = vpack.c.bf16 %v609, %v609
    %v640 = vpack.c.bf16 %v616, %v616
    %v641 = vpack.c.bf16 %v623, %v623
    %v642 = vpack.c.bf16 %v630, %v630
    %v643 = vpack.c.bf16 %v637, %v637
    %v644 = vld [vmem:[#allocation10] sm:$0xf]
    %v645 = vld [vmem:[#allocation10 + $0x4] sm:$0xf]
    %v646 = vld [vmem:[#allocation10 + $0x8] sm:$0xf]
    %v647 = vld [vmem:[#allocation10 + $0xc] sm:$0xf]
    %v648 = vld [vmem:[#allocation10 + $0x10] sm:$0xf]
    %v649 = vld [vmem:[#allocation10 + $0x14] sm:$0xf]
    %v650 = vld [vmem:[#allocation10 + $0x18] sm:$0xf]
    %v651 = vld [vmem:[#allocation10 + $0x1c] sm:$0xf]
    %v652 = vld [vmem:[#allocation10 + $0x20] sm:$0xf]
    %v653 = vld [vmem:[#allocation10 + $0x24] sm:$0xf]
    %v654 = vld [vmem:[#allocation10 + $0x28] sm:$0xf]
    %v655 = vld [vmem:[#allocation10 + $0x2c] sm:$0xf]
    %v656 = vld [vmem:[#allocation10 + $0x30] sm:$0xf]
    %v657 = vld [vmem:[#allocation10 + $0x34] sm:$0xf]
    %v658 = vld [vmem:[#allocation10 + $0x38] sm:$0xf]
    %v659 = vld [vmem:[#allocation10 + $0x3c] sm:$0xf]
    %v660 = vld [vmem:[#allocation10 + $0x40] sm:$0xf]
    %v661 = vld [vmem:[#allocation10 + $0x44] sm:$0xf]
    %v662 = vld [vmem:[#allocation10 + $0x48] sm:$0xf]
    %v663 = vld [vmem:[#allocation10 + $0x4c] sm:$0xf]
    %v664 = vld [vmem:[#allocation10 + $0x50] sm:$0xf]
    %v665 = vld [vmem:[#allocation10 + $0x54] sm:$0xf]
    %v666 = vld [vmem:[#allocation10 + $0x58] sm:$0xf]
    %v667 = vld [vmem:[#allocation10 + $0x5c] sm:$0xf]
    %v668 = vld [vmem:[#allocation10 + $0x60] sm:$0xf]
    %v669 = vld [vmem:[#allocation10 + $0x64] sm:$0xf]
    %v670 = vld [vmem:[#allocation10 + $0x68] sm:$0xf]
    %v671 = vld [vmem:[#allocation10 + $0x6c] sm:$0xf]
    %v672 = vld [vmem:[#allocation10 + $0x70] sm:$0xf]
    %v673 = vld [vmem:[#allocation10 + $0x74] sm:$0xf]
    %v674 = vld [vmem:[#allocation10 + $0x78] sm:$0xf]
    %v675 = vld [vmem:[#allocation10 + $0x7c] sm:$0xf]
    %v676 = vld [vmem:[#allocation10 + $0x80] sm:$0xf]
    %v677 = vld [vmem:[#allocation10 + $0x84] sm:$0xf]
    %v678 = vld [vmem:[#allocation10 + $0x88] sm:$0xf]
    %v679 = vld [vmem:[#allocation10 + $0x8c] sm:$0xf]
    %v680 = vld [vmem:[#allocation10 + $0x90] sm:$0xf]
    %v681 = vld [vmem:[#allocation10 + $0x94] sm:$0xf]
    %v682 = vld [vmem:[#allocation10 + $0x98] sm:$0xf]
    %v683 = vld [vmem:[#allocation10 + $0x9c] sm:$0xf]
    %v684 = vld [vmem:[#allocation10 + $0xa0] sm:$0xf]
    %v685 = vld [vmem:[#allocation10 + $0xa4] sm:$0xf]
    %v686 = vld [vmem:[#allocation10 + $0xa8] sm:$0xf]
    %v687 = vld [vmem:[#allocation10 + $0xac] sm:$0xf]
    %v688 = vld [vmem:[#allocation10 + $0xb0] sm:$0xf]
    %v689 = vld [vmem:[#allocation10 + $0xb4] sm:$0xf]
    %v690 = vld [vmem:[#allocation10 + $0xb8] sm:$0xf]
    %v691 = vld [vmem:[#allocation10 + $0xbc] sm:$0xf]
    %v692 = vld [vmem:[%s5] sm:$0x1]
    %v694 = vperm.slane %v692, 0
    %v702 = vunpack.c.l.b16 %v638
    %v703 = vunpack.c.l.b16 %v639
    %v704 = vunpack.c.l.b16 %v640
    %v705 = vunpack.c.l.b16 %v641
    %v706 = vunpack.c.l.b16 %v642
    %v707 = vunpack.c.l.b16 %v643
    %vm708 = vcmask 1041409
    %v709 = vsel %vm708, %v705, %v702
    %v710 = vsel %vm708, %v706, %v703
    %v711 = vsel %vm708, %v707, %v704
    %v712 = vpack.c.b16 %v709, %v709
    %v713 = vpack.c.b16 %v710, %v710
    %v714 = vpack.c.b16 %v711, %v711
    %v766 = vunpack.c.l.b16 %v644
    %v767 = vunpack.c.l.b16 %v645
    %v768 = vunpack.c.l.b16 %v646
    %v769 = vunpack.c.l.b16 %v647
    %v770 = vunpack.c.l.b16 %v648
    %v771 = vunpack.c.l.b16 %v649
    %v772 = vunpack.c.l.b16 %v650
    %v773 = vunpack.c.l.b16 %v651
    %v774 = vunpack.c.l.b16 %v652
    %v775 = vunpack.c.l.b16 %v653
    %v776 = vunpack.c.l.b16 %v654
    %v777 = vunpack.c.l.b16 %v655
    %v778 = vunpack.c.l.b16 %v656
    %v779 = vunpack.c.l.b16 %v657
    %v780 = vunpack.c.l.b16 %v658
    %v781 = vunpack.c.l.b16 %v659
    %v782 = vunpack.c.l.b16 %v660
    %v783 = vunpack.c.l.b16 %v661
    %v784 = vunpack.c.l.b16 %v662
    %v785 = vunpack.c.l.b16 %v663
    %v786 = vunpack.c.l.b16 %v664
    %v787 = vunpack.c.l.b16 %v665
    %v788 = vunpack.c.l.b16 %v666
    %v789 = vunpack.c.l.b16 %v667
    %v790 = vunpack.c.l.b16 %v668
    %v791 = vunpack.c.l.b16 %v669
    %v792 = vunpack.c.l.b16 %v670
    %v793 = vunpack.c.l.b16 %v671
    %v794 = vunpack.c.l.b16 %v672
    %v795 = vunpack.c.l.b16 %v673
    %v796 = vunpack.c.l.b16 %v674
    %v797 = vunpack.c.l.b16 %v675
    %v798 = vunpack.c.l.b16 %v676
    %v799 = vunpack.c.l.b16 %v677
    %v800 = vunpack.c.l.b16 %v678
    %v801 = vunpack.c.l.b16 %v679
    %v802 = vunpack.c.l.b16 %v680
    %v803 = vunpack.c.l.b16 %v681
    %v804 = vunpack.c.l.b16 %v682
    %v805 = vunpack.c.l.b16 %v683
    %v806 = vunpack.c.l.b16 %v684
    %v807 = vunpack.c.l.b16 %v685
    %v808 = vunpack.c.l.b16 %v686
    %v809 = vunpack.c.l.b16 %v687
    %v810 = vunpack.c.l.b16 %v688
    %v811 = vunpack.c.l.b16 %v689
    %v812 = vunpack.c.l.b16 %v690
    %v813 = vunpack.c.l.b16 %v691
    %v814 = vpack.c.b16 %v767, %v766
    %v815 = vpack.c.b16 %v769, %v768
    %v816 = vpack.c.b16 %v771, %v770
    %v817 = vpack.c.b16 %v773, %v772
    %v818 = vpack.c.b16 %v775, %v774
    %v819 = vpack.c.b16 %v777, %v776
    %v820 = vpack.c.b16 %v779, %v778
    %v821 = vpack.c.b16 %v781, %v780
    %v822 = vpack.c.b16 %v783, %v782
    %v823 = vpack.c.b16 %v785, %v784
    %v824 = vpack.c.b16 %v787, %v786
    %v825 = vpack.c.b16 %v789, %v788
    %v826 = vpack.c.b16 %v791, %v790
    %v827 = vpack.c.b16 %v793, %v792
    %v828 = vpack.c.b16 %v795, %v794
    %v829 = vpack.c.b16 %v797, %v796
    %v830 = vpack.c.b16 %v799, %v798
    %v831 = vpack.c.b16 %v801, %v800
    %v832 = vpack.c.b16 %v803, %v802
    %v833 = vpack.c.b16 %v805, %v804
    %v834 = vpack.c.b16 %v807, %v806
    %v835 = vpack.c.b16 %v809, %v808
    %v836 = vpack.c.b16 %v811, %v810
    %v837 = vpack.c.b16 %v813, %v812
    %862 = vmatpush.bf16.msra.mxu0 %v821
    %863 = vmatpush.bf16.msra.mxu0 %v820
    %864 = vmatpush.bf16.msra.mxu0 %v819
    %865 = vmatpush.bf16.msra.mxu0 %v818
    %866 = vmatpush.bf16.msra.mxu0 %v817
    %867 = vmatpush.bf16.msra.mxu0 %v816
    %868 = vmatpush.bf16.msra.mxu0 %v815
    %869 = vmatpush.bf16.msra.mxu0 %v814
    %870 = vmatmul.bf16.gmra.mxu0 %v712
    %v871 = vpop.f32.mrf.mxu0
    %v872 = vadd.f32 %v694, %v871
    %v873 = vpop.f32.mrf.mxu0
    %874 = vdwg.mxu0
    %875 = vmatpush.bf16.msra.mxu0 %v829
    %876 = vmatpush.bf16.msra.mxu0 %v828
    %877 = vmatpush.bf16.msra.mxu0 %v827
    %878 = vmatpush.bf16.msra.mxu0 %v826
    %879 = vmatpush.bf16.msra.mxu0 %v825
    %880 = vmatpush.bf16.msra.mxu0 %v824
    %881 = vmatpush.bf16.msra.mxu0 %v823
    %882 = vmatpush.bf16.msra.mxu0 %v822
    %883 = vmatmul.bf16.gmra.mxu0 %v713
    %v884 = vpop.f32.mrf.mxu0
    %v885 = vadd.f32 %v872, %v884
    %v886 = vpop.f32.mrf.mxu0
    %887 = vdwg.mxu0
    %888 = vmatpush.bf16.msra.mxu0 %v837
    %889 = vmatpush.bf16.msra.mxu0 %v836
    %890 = vmatpush.bf16.msra.mxu0 %v835
    %891 = vmatpush.bf16.msra.mxu0 %v834
    %892 = vmatpush.bf16.msra.mxu0 %v833
    %893 = vmatpush.bf16.msra.mxu0 %v832
    %894 = vmatpush.bf16.msra.mxu0 %v831
    %895 = vmatpush.bf16.msra.mxu0 %v830
    %896 = vmatmul.bf16.gmra.mxu0 %v714
    %v897 = vpop.f32.mrf.mxu0
    %v898 = vadd.f32 %v885, %v897
    %v899 = vpop.f32.mrf.mxu0
    %900 = vdwg.mxu0
    %901 = vst [vmem:[#allocation11] sm:$0x3] %v898
    // Predicated region
    $region46: #{tpu_custom_call.1} parent=1 // pred_check
      _
    $region47: #{tpu_custom_call.1} parent=1 // pred_check_branch
      %903 = sbr.rel (0) target = $region49
    $region48: #{tpu_custom_call.1} parent=1 // pred_region
      %905 = vsyncadd [#allocation4], 0
      %s907 = sshll.u32 [#allocation11], 4
      %s908 = int_to_ptr.vmem [resolvable:$true] %s907
      %s909 = sshll.u32 %s6, 4
      %s910 = int_to_ptr.hbm [resolvable:$true] %s909
      %912 = dma.vmem_to_hbm [thread:$0]  %s908, 32, %s910, [#allocation4]
    $region49: #{tpu_custom_call.1} parent=1 // pred_fallthru
      _
    // Predicated region
    $region50: #{tpu_custom_call.1} parent=1 // pred_check
      _
    $region51: #{tpu_custom_call.1} parent=1 // pred_check_branch
      %914 = sbr.rel (0) target = $region53
    $region52: #{tpu_custom_call.1} parent=1 // pred_region
      %916 = dma.done [#allocation4], 32
    $region53: #{tpu_custom_call.1} parent=1 // pred_fallthru
      _
    %917 = vsyncpa [#allocation3], 1
    %918 = vsyncpa [#allocation6], 1
    %919 = vsyncpa [#allocation9], 1
    %920 = vsyncpa [#allocation4], 1

</llo_original>
